<compile_context>
chip_gen: v7x
topology: tpu7x:2x2x1
jax: 0.10.0
libtpu: 0.0.40
codegen_flags: <defaults>
</compile_context>

<pallas_src>
import jax
import jax.numpy as jnp
from jax.experimental import pallas as pl
from jax.experimental.pallas import tpu as pltpu


def _round_up(x, m):
    return ((x + m - 1) // m) * m


def _cdiv(a, b):
    return (a + b - 1) // b


def attention_kernel(emb_ref, sum_ref, bcast_ref, w_ref, seg_ref, out_ref):
    # emb_ref:   (gb*Npad, PF)  packed node embeddings (zero rows for padding)
    # sum_ref:   (gb, gb*Npad)  kron(I_gb, ones(1, Npad))   -- node-sum reducer
    # bcast_ref: (gb*Npad, gb)  kron(I_gb, ones(Npad, 1))   -- row broadcaster
    # w_ref:     (PF, PF)       kron(I_P, W) / N            -- mean folded in
    # seg_ref:   (PF, PF)       kron(I_P, ones(F, F))       -- segmented reducer
    # out_ref:   (gb, PF)       packed graph representations (lane-dense)
    emb = emb_ref[...]
    sum_mat = sum_ref[...]
    bcast = bcast_ref[...]
    w_over_n = w_ref[...]
    seg = seg_ref[...]

    # global_context per packed graph: (sum over nodes) @ (W / N)
    node_sums = jnp.dot(sum_mat, emb, preferred_element_type=jnp.float32)   # (gb, PF)
    gc = jnp.dot(node_sums, w_over_n, preferred_element_type=jnp.float32)   # (gb, PF)
    transformed = jnp.tanh(gc)                                              # (gb, PF)

    # broadcast tanh(context) back to every node row of its graph (MXU)
    t_rows = jnp.dot(bcast, transformed, preferred_element_type=jnp.float32)  # (gb*Npad, PF)

    # logits: per-graph 32-lane segmented dot; the block-diagonal ones matmul
    # both reduces the segment and re-broadcasts the logit across its lanes.
    prod = emb * t_rows                                                     # (gb*Npad, PF)
    logits = jnp.dot(prod, seg, preferred_element_type=jnp.float32)         # (gb*Npad, PF)
    scores = jax.nn.sigmoid(logits)                                         # (gb*Npad, PF)

    # representation: score-weighted node sum (N-reduction on the MXU)
    weighted = emb * scores                                                 # (gb*Npad, PF)
    out_ref[...] = jnp.dot(sum_mat, weighted, preferred_element_type=jnp.float32)


def attention_module_batched(embeddings, weight_matrix):
    """embeddings: (B, N, F) float32, weight_matrix: (F, F) float32 -> (B, F, 1)."""
    b, n, f = embeddings.shape
    assert weight_matrix.shape == (f, f)

    # lane packing factor: P graphs share one 128-lane vreg row
    p = 128 // f if (f <= 128 and 128 % f == 0) else 1
    pf = p * f

    npad = _round_up(n, 8)
    bp = _cdiv(b, p)                              # packed rows needed

    # packed rows per grid step: multiple of 8, <= 256, >= 2 steps when possible
    gb = min(256, _round_up(bp, 8))
    if bp > 8:
        gb = min(gb, _round_up(_cdiv(bp, 2), 8))  # keep >= 2 parallel steps (v7x 2 TCs)
    max_gb = max(8, ((4 * 1024 * 1024) // max(1, npad * pf * 4)) // 8 * 8)
    gb = max(8, min(gb, max_gb))                  # ~4 MiB per-step block cap (v7x VMEM)
    bp_pad = _round_up(bp, gb)
    steps = bp_pad // gb
    b_pad = bp_pad * p

    # zero-pad nodes and graphs, then pack P graphs along the lane axis
    emb = embeddings.astype(jnp.float32)
    emb = jnp.pad(emb, ((0, b_pad - b), (0, npad - n), (0, 0)))
    emb = emb.reshape(bp_pad, p, npad, f).transpose(0, 2, 1, 3)
    emb = emb.reshape(bp_pad * npad, pf)

    w = weight_matrix.astype(jnp.float32)
    eye_p = jnp.eye(p, dtype=jnp.float32)
    w_over_n = jnp.kron(eye_p, w) * (1.0 / n)                          # (pf, pf)
    seg = jnp.kron(eye_p, jnp.ones((f, f), jnp.float32))               # (pf, pf)
    eye_g = jnp.eye(gb, dtype=jnp.float32)
    sum_mat = jnp.kron(eye_g, jnp.ones((1, npad), jnp.float32))        # (gb, gb*npad)
    bcast = jnp.kron(eye_g, jnp.ones((npad, 1), jnp.float32))          # (gb*npad, gb)

    out = pl.pallas_call(
        attention_kernel,
        out_shape=jax.ShapeDtypeStruct((bp_pad, pf), jnp.float32),
        grid=(steps,),
        in_specs=[
            pl.BlockSpec((gb * npad, pf), lambda i: (i, 0)),   # node rows per step
            pl.BlockSpec((gb, gb * npad), lambda i: (0, 0)),   # shared, resident
            pl.BlockSpec((gb * npad, gb), lambda i: (0, 0)),
            pl.BlockSpec((pf, pf), lambda i: (0, 0)),
            pl.BlockSpec((pf, pf), lambda i: (0, 0)),
        ],
        out_specs=pl.BlockSpec((gb, pf), lambda i: (i, 0)),    # lane-dense slab
        compiler_params=pltpu.CompilerParams(
            dimension_semantics=("parallel",)),
    )(emb, sum_mat, bcast, w_over_n, seg)

    # unpack: (bp_pad, P*F) -> (B, F) -> (B, F, 1)  (free layout plumbing)
    rep = out.reshape(bp_pad * p, f)[:b]
    return rep[:, :, None]


def attention_module(embedding, weight_matrix):
    """Single-graph entry point matching the PyTorch module: (N, F) -> (F, 1)."""
    return attention_module_batched(embedding[None], weight_matrix)[0]


def reference(embedding, weight_matrix):
    gc = jnp.mean(embedding @ weight_matrix, axis=0)
    tg = jnp.tanh(gc)
    scores = jax.nn.sigmoid(embedding @ tg.reshape(-1, 1))
    return embedding.T @ scores


if __name__ == "__main__":
    key = jax.random.PRNGKey(0)
    k_emb, k_w = jax.random.split(key)

    B = 6          # graphs (exercises batch padding: not a multiple of the pack factor)
    N = 10         # nodes per graph (exercises node padding to a multiple of 8)
    F = 32         # args.filters_3

    embeddings = jax.random.normal(k_emb, (B, N, F), dtype=jnp.float32)

    # Xavier-uniform init for weight_matrix (F, F): bound = sqrt(6 / (F + F))
    bound = (6.0 / (F + F)) ** 0.5
    weight_matrix = jax.random.uniform(
        k_w, (F, F), dtype=jnp.float32, minval=-bound, maxval=bound)

    out = jax.block_until_ready(attention_module_batched(embeddings, weight_matrix))
    assert out.shape == (B, F, 1)

    for i in range(B):
        ref = reference(embeddings[i], weight_matrix)
        assert jnp.allclose(out[i], ref, atol=1e-4, rtol=1e-4)

    # Also exercise the single-graph path (PyTorch-equivalent signature).
    single = jax.block_until_ready(attention_module(embeddings[0], weight_matrix))
    assert single.shape == (F, 1)
    assert jnp.allclose(single, reference(embeddings[0], weight_matrix),
                        atol=1e-4, rtol=1e-4)

    print("KERNEL_OK")
</pallas_src>

<mosaic_0001>
module attributes {stable_mosaic.version = 11 : i64} {
  func.func @attention_kernel(%arg0: i32, %arg1: memref<128x128xf32, #tpu.memory_space<vmem>>, %arg2: memref<8x128xf32, #tpu.memory_space<vmem>>, %arg3: memref<128x8xf32, #tpu.memory_space<vmem>>, %arg4: memref<128x128xf32, #tpu.memory_space<vmem>>, %arg5: memref<128x128xf32, #tpu.memory_space<vmem>>, %arg6: memref<8x128xf32, #tpu.memory_space<vmem>>) attributes {dimension_semantics = [#tpu.dimension_semantics<parallel>], iteration_bounds = array<i64: 1>, scalar_prefetch = 0 : i64, scratch_operands = 0 : i64, tpu.core_type = #tpu.core_type<tc>, window_params = [{transform_indices = @transform_0, window_bounds = array<i64: 128, 128>}, {pipeline_mode = #tpu.pipeline_mode<synchronous>, transform_indices = @transform_1, window_bounds = array<i64: 8, 128>}, {pipeline_mode = #tpu.pipeline_mode<synchronous>, transform_indices = @transform_2, window_bounds = array<i64: 128, 8>}, {pipeline_mode = #tpu.pipeline_mode<synchronous>, transform_indices = @transform_3, window_bounds = array<i64: 128, 128>}, {pipeline_mode = #tpu.pipeline_mode<synchronous>, transform_indices = @transform_4, window_bounds = array<i64: 128, 128>}, {transform_indices = @transform_5, window_bounds = array<i64: 8, 128>}]} {
    %c0 = arith.constant 0 : index
    %c0_0 = arith.constant 0 : index
    %0 = vector.load %arg1[%c0, %c0_0] : memref<128x128xf32, #tpu.memory_space<vmem>>, vector<128x128xf32>
    %c0_1 = arith.constant 0 : index
    %c0_2 = arith.constant 0 : index
    %1 = vector.load %arg2[%c0_1, %c0_2] : memref<8x128xf32, #tpu.memory_space<vmem>>, vector<8x128xf32>
    %c0_3 = arith.constant 0 : index
    %c0_4 = arith.constant 0 : index
    %2 = vector.load %arg3[%c0_3, %c0_4] : memref<128x8xf32, #tpu.memory_space<vmem>>, vector<128x8xf32>
    %c0_5 = arith.constant 0 : index
    %c0_6 = arith.constant 0 : index
    %3 = vector.load %arg4[%c0_5, %c0_6] : memref<128x128xf32, #tpu.memory_space<vmem>>, vector<128x128xf32>
    %c0_7 = arith.constant 0 : index
    %c0_8 = arith.constant 0 : index
    %4 = vector.load %arg5[%c0_7, %c0_8] : memref<128x128xf32, #tpu.memory_space<vmem>>, vector<128x128xf32>
    %cst = arith.constant dense<0.000000e+00> : vector<8x128xf32>
    %5 = tpu.matmul %1, %0, %cst {dimension_numbers = #tpu.dot_dimension_numbers<[1], [0], [0], [1], [0, 0, 1, 1], [], []>} : vector<8x128xf32>, vector<128x128xf32>, vector<8x128xf32> -> vector<8x128xf32>
    %cst_9 = arith.constant dense<0.000000e+00> : vector<8x128xf32>
    %6 = tpu.matmul %5, %3, %cst_9 {dimension_numbers = #tpu.dot_dimension_numbers<[1], [0], [0], [1], [0, 0, 1, 1], [], []>} : vector<8x128xf32>, vector<128x128xf32>, vector<8x128xf32> -> vector<8x128xf32>
    %7 = math.tanh %6 : vector<8x128xf32>
    %cst_10 = arith.constant dense<0.000000e+00> : vector<128x128xf32>
    %8 = tpu.matmul %2, %7, %cst_10 {dimension_numbers = #tpu.dot_dimension_numbers<[1], [0], [0], [1], [0, 0, 1, 1], [], []>} : vector<128x8xf32>, vector<8x128xf32>, vector<128x128xf32> -> vector<128x128xf32>
    %9 = arith.mulf %0, %8 : vector<128x128xf32>
    %cst_11 = arith.constant dense<0.000000e+00> : vector<128x128xf32>
    %10 = tpu.matmul %9, %4, %cst_11 {dimension_numbers = #tpu.dot_dimension_numbers<[1], [0], [0], [1], [0, 0, 1, 1], [], []>} : vector<128x128xf32>, vector<128x128xf32>, vector<128x128xf32> -> vector<128x128xf32>
    %11 = arith.negf %10 : vector<128x128xf32>
    %12 = math.exp %11 : vector<128x128xf32>
    %cst_12 = arith.constant 1.000000e+00 : f32
    %13 = vector.broadcast %cst_12 : f32 to vector<128x128xf32>
    %14 = arith.addf %13, %12 : vector<128x128xf32>
    %15 = arith.divf %13, %14 : vector<128x128xf32>
    %16 = arith.mulf %0, %15 : vector<128x128xf32>
    %cst_13 = arith.constant dense<0.000000e+00> : vector<8x128xf32>
    %17 = tpu.matmul %1, %16, %cst_13 {dimension_numbers = #tpu.dot_dimension_numbers<[1], [0], [0], [1], [0, 0, 1, 1], [], []>} : vector<8x128xf32>, vector<128x128xf32>, vector<8x128xf32> -> vector<8x128xf32>
    %c0_14 = arith.constant 0 : index
    %c0_15 = arith.constant 0 : index
    %18 = vector.load %arg6[%c0_14, %c0_15] : memref<8x128xf32, #tpu.memory_space<vmem>>, vector<8x128xf32>
    tpu.vector_store %arg6[%c0_14, %c0_15], %17 {strides = array<i32>} : memref<8x128xf32, #tpu.memory_space<vmem>>, vector<8x128xf32>,
    return
  }
  func.func @transform_0(%arg0: i32) -> (i32, i32) {
    %c0_i32 = arith.constant 0 : i32
    %c0_i32_0 = arith.constant 0 : i32
    return %arg0, %c0_i32 : i32, i32
  }
  func.func @transform_1(%arg0: i32) -> (i32, i32) {
    %c0_i32 = arith.constant 0 : i32
    %c0_i32_0 = arith.constant 0 : i32
    %c0_i32_1 = arith.constant 0 : i32
    return %c0_i32, %c0_i32_0 : i32, i32
  }
  func.func @transform_2(%arg0: i32) -> (i32, i32) {
    %c0_i32 = arith.constant 0 : i32
    %c0_i32_0 = arith.constant 0 : i32
    %c0_i32_1 = arith.constant 0 : i32
    return %c0_i32, %c0_i32_0 : i32, i32
  }
  func.func @transform_3(%arg0: i32) -> (i32, i32) {
    %c0_i32 = arith.constant 0 : i32
    %c0_i32_0 = arith.constant 0 : i32
    %c0_i32_1 = arith.constant 0 : i32
    return %c0_i32, %c0_i32_0 : i32, i32
  }
  func.func @transform_4(%arg0: i32) -> (i32, i32) {
    %c0_i32 = arith.constant 0 : i32
    %c0_i32_0 = arith.constant 0 : i32
    %c0_i32_1 = arith.constant 0 : i32
    return %c0_i32, %c0_i32_0 : i32, i32
  }
  func.func @transform_5(%arg0: i32) -> (i32, i32) {
    %c0_i32 = arith.constant 0 : i32
    %c0_i32_0 = arith.constant 0 : i32
    return %arg0, %c0_i32 : i32, i32
  }
}

</mosaic_0001>

<llo_original>
// kernel: tpu_custom_call.1
$region0: #{tpu_custom_call.1}
  #allocation0 [shape = 'u32[]', space=smem, size = 0x4, offset = 0x4, fixed_abs, tag = 'smem constant byte address 0x4 - core index']
  #allocation1 [shape = 'u32[144,128]{1,0:T(1,128)}', space=vmem, size = 0x12000, scoped, tag = 'internal scratch']
  %s0 = inlined_call_operand.vmem [shape: f32[128,128], index: 0, kind: input, shape index: {}]
  %s1 = inlined_call_operand.vmem [shape: f32[8,128], index: 1, kind: input, shape index: {}]
  %s2 = inlined_call_operand.vmem [shape: f32[128,8], index: 2, kind: input, shape index: {}]
  %s3 = inlined_call_operand.hbm [shape: f32[128,128], index: 3, kind: input, shape index: {}]
  %s4 = inlined_call_operand.hbm [shape: f32[128,128], index: 4, kind: input, shape index: {}]
  %s5 = inlined_call_operand.hbm [shape: f32[8,128], index: 5, kind: output, shape index: {}]
  %s6 = sld [smem:[#allocation0]]
  $region38: #{tpu_custom_call.1} parent=0
    _
  %s8 = ssub.s32 1, %s6
  %s9 = scalar_select 0, %s8, %s6
  $region1: #{tpu_custom_call.1} parent=0
    #allocation2 [shape = 'u8[65536]{0}', space=vmem, size = 0x10000, scoped, tag = 'input window, operand 3, single buffered']
    #allocation3 [shape = 's32[1]{0}', space=sflag, size = 0x4, scoped, tag = 'scoped memory for tpu_custom_call.1']
    #allocation4 [shape = 's32[1]{0}', space=sflag, size = 0x4, scoped, tag = 'scoped memory for tpu_custom_call.1']
    #allocation5 [shape = 'u8[65536]{0}', space=vmem, size = 0x10000, scoped, tag = 'input window, operand 4, single buffered']
    #allocation6 [shape = 's32[1]{0}', space=sflag, size = 0x4, scoped, tag = 'scoped memory for tpu_custom_call.1']
    #allocation7 [shape = 'u8[4096]{0}', space=vmem, size = 0x1000, scoped, tag = 'output window, operand 0, single buffered']
    %10 = vsyncpa [#allocation3], 0
    %11 = vsyncpa [#allocation6], 0
    %12 = vsyncpa [#allocation4], 0
    // Predicated region
    $region2: #{tpu_custom_call.1} parent=1 // pred_check
      _
    $region3: #{tpu_custom_call.1} parent=1 // pred_check_branch
      %14 = sbr.rel (0) target = $region5
    $region4: #{tpu_custom_call.1} parent=1 // pred_region
      _
    $region5: #{tpu_custom_call.1} parent=1 // pred_fallthru
      _
    // Predicated region
    $region6: #{tpu_custom_call.1} parent=1 // pred_check
      _
    $region7: #{tpu_custom_call.1} parent=1 // pred_check_branch
      %16 = sbr.rel (0) target = $region9
    $region8: #{tpu_custom_call.1} parent=1 // pred_region
      _
    $region9: #{tpu_custom_call.1} parent=1 // pred_fallthru
      _
    // Predicated region
    $region10: #{tpu_custom_call.1} parent=1 // pred_check
      _
    $region11: #{tpu_custom_call.1} parent=1 // pred_check_branch
      %18 = sbr.rel (0) target = $region13
    $region12: #{tpu_custom_call.1} parent=1 // pred_region
      _
    $region13: #{tpu_custom_call.1} parent=1 // pred_fallthru
      _
    // Predicated region
    $region14: #{tpu_custom_call.1} parent=1 // pred_check
      _
    $region15: #{tpu_custom_call.1} parent=1 // pred_check_branch
      %20 = sbr.rel (0) target = $region17
    $region16: #{tpu_custom_call.1} parent=1 // pred_region
      %s22 = ssub.s32 2048, 2048
      %23 = vsyncadd [#allocation3], %s22
      %s24 = sshll.u32 [#allocation2], 4
      %s25 = int_to_ptr.vmem [resolvable:$true] %s24
      %30 = dma.hbm_to_vmem [thread:$0]  %s3, 2048, %s25, [#allocation3], 128, 128, 8
    $region17: #{tpu_custom_call.1} parent=1 // pred_fallthru
      _
    // Predicated region
    $region18: #{tpu_custom_call.1} parent=1 // pred_check
      _
    $region19: #{tpu_custom_call.1} parent=1 // pred_check_branch
      %32 = sbr.rel (0) target = $region21
    $region20: #{tpu_custom_call.1} parent=1 // pred_region
      %s34 = ssub.s32 2048, 2048
      %35 = vsyncadd [#allocation6], %s34
      %s36 = sshll.u32 [#allocation5], 4
      %s37 = int_to_ptr.vmem [resolvable:$true] %s36
      %42 = dma.hbm_to_vmem [thread:$0]  %s4, 2048, %s37, [#allocation6], 128, 128, 8
    $region21: #{tpu_custom_call.1} parent=1 // pred_fallthru
      _
    // Predicated region
    $region22: #{tpu_custom_call.1} parent=1 // pred_check
      _
    $region23: #{tpu_custom_call.1} parent=1 // pred_check_branch
      %44 = sbr.rel (0) target = $region25
    $region24: #{tpu_custom_call.1} parent=1 // pred_region
      %45 = dma.done [#allocation3], 2048
    $region25: #{tpu_custom_call.1} parent=1 // pred_fallthru
      _
    // Predicated region
    $region26: #{tpu_custom_call.1} parent=1 // pred_check
      _
    $region27: #{tpu_custom_call.1} parent=1 // pred_check_branch
      %47 = sbr.rel (0) target = $region29
    $region28: #{tpu_custom_call.1} parent=1 // pred_region
      %48 = dma.done [#allocation6], 2048
    $region29: #{tpu_custom_call.1} parent=1 // pred_fallthru
      _
    %v49 = vld [vmem:[%s0] sm:$0xff]
    %v50 = vld [vmem:[%s0 + $0x8] sm:$0xff]
    %v51 = vld [vmem:[%s0 + $0x10] sm:$0xff]
    %v52 = vld [vmem:[%s0 + $0x18] sm:$0xff]
    %v53 = vld [vmem:[%s0 + $0x20] sm:$0xff]
    %v54 = vld [vmem:[%s0 + $0x28] sm:$0xff]
    %v55 = vld [vmem:[%s0 + $0x30] sm:$0xff]
    %v56 = vld [vmem:[%s0 + $0x38] sm:$0xff]
    %v57 = vld [vmem:[%s0 + $0x40] sm:$0xff]
    %v58 = vld [vmem:[%s0 + $0x48] sm:$0xff]
    %v59 = vld [vmem:[%s0 + $0x50] sm:$0xff]
    %v60 = vld [vmem:[%s0 + $0x58] sm:$0xff]
    %v61 = vld [vmem:[%s0 + $0x60] sm:$0xff]
    %v62 = vld [vmem:[%s0 + $0x68] sm:$0xff]
    %v63 = vld [vmem:[%s0 + $0x70] sm:$0xff]
    %v64 = vld [vmem:[%s0 + $0x78] sm:$0xff]
    %v65 = vld [vmem:[%s1] sm:$0xff]
    %v66 = vld [vmem:[%s2] sm:$0xff]
    %v67 = vld [vmem:[%s2 + $0x8] sm:$0xff]
    %v68 = vld [vmem:[%s2 + $0x10] sm:$0xff]
    %v69 = vld [vmem:[%s2 + $0x18] sm:$0xff]
    %v70 = vld [vmem:[%s2 + $0x20] sm:$0xff]
    %v71 = vld [vmem:[%s2 + $0x28] sm:$0xff]
    %v72 = vld [vmem:[%s2 + $0x30] sm:$0xff]
    %v73 = vld [vmem:[%s2 + $0x38] sm:$0xff]
    %v74 = vld [vmem:[%s2 + $0x40] sm:$0xff]
    %v75 = vld [vmem:[%s2 + $0x48] sm:$0xff]
    %v76 = vld [vmem:[%s2 + $0x50] sm:$0xff]
    %v77 = vld [vmem:[%s2 + $0x58] sm:$0xff]
    %v78 = vld [vmem:[%s2 + $0x60] sm:$0xff]
    %v79 = vld [vmem:[%s2 + $0x68] sm:$0xff]
    %v80 = vld [vmem:[%s2 + $0x70] sm:$0xff]
    %v81 = vld [vmem:[%s2 + $0x78] sm:$0xff]
    %v82 = vld [vmem:[#allocation2] sm:$0xff]
    %v83 = vld [vmem:[#allocation2 + $0x8] sm:$0xff]
    %v84 = vld [vmem:[#allocation2 + $0x10] sm:$0xff]
    %v85 = vld [vmem:[#allocation2 + $0x18] sm:$0xff]
    %v86 = vld [vmem:[#allocation2 + $0x20] sm:$0xff]
    %v87 = vld [vmem:[#allocation2 + $0x28] sm:$0xff]
    %v88 = vld [vmem:[#allocation2 + $0x30] sm:$0xff]
    %v89 = vld [vmem:[#allocation2 + $0x38] sm:$0xff]
    %v90 = vld [vmem:[#allocation2 + $0x40] sm:$0xff]
    %v91 = vld [vmem:[#allocation2 + $0x48] sm:$0xff]
    %v92 = vld [vmem:[#allocation2 + $0x50] sm:$0xff]
    %v93 = vld [vmem:[#allocation2 + $0x58] sm:$0xff]
    %v94 = vld [vmem:[#allocation2 + $0x60] sm:$0xff]
    %v95 = vld [vmem:[#allocation2 + $0x68] sm:$0xff]
    %v96 = vld [vmem:[#allocation2 + $0x70] sm:$0xff]
    %v97 = vld [vmem:[#allocation2 + $0x78] sm:$0xff]
    %v98 = vld [vmem:[#allocation5] sm:$0xff]
    %v99 = vld [vmem:[#allocation5 + $0x8] sm:$0xff]
    %v100 = vld [vmem:[#allocation5 + $0x10] sm:$0xff]
    %v101 = vld [vmem:[#allocation5 + $0x18] sm:$0xff]
    %v102 = vld [vmem:[#allocation5 + $0x20] sm:$0xff]
    %v103 = vld [vmem:[#allocation5 + $0x28] sm:$0xff]
    %v104 = vld [vmem:[#allocation5 + $0x30] sm:$0xff]
    %v105 = vld [vmem:[#allocation5 + $0x38] sm:$0xff]
    %v106 = vld [vmem:[#allocation5 + $0x40] sm:$0xff]
    %v107 = vld [vmem:[#allocation5 + $0x48] sm:$0xff]
    %v108 = vld [vmem:[#allocation5 + $0x50] sm:$0xff]
    %v109 = vld [vmem:[#allocation5 + $0x58] sm:$0xff]
    %v110 = vld [vmem:[#allocation5 + $0x60] sm:$0xff]
    %v111 = vld [vmem:[#allocation5 + $0x68] sm:$0xff]
    %v112 = vld [vmem:[#allocation5 + $0x70] sm:$0xff]
    %v113 = vld [vmem:[#allocation5 + $0x78] sm:$0xff]
    %114 = vmatprep.subr.mxu0 0.0
    %115 = vmatpush1.msra.mxu0 %v49
    %116 = vmatprep.subr.mxu0 0.0
    %117 = vmatpush1.msra.mxu0 %v50
    %118 = vmatprep.subr.mxu0 0.0
    %119 = vmatpush1.msra.mxu0 %v51
    %120 = vmatprep.subr.mxu0 0.0
    %121 = vmatpush1.msra.mxu0 %v52
    %122 = vmatprep.subr.mxu0 0.0
    %123 = vmatpush1.msra.mxu0 %v53
    %124 = vmatprep.subr.mxu0 0.0
    %125 = vmatpush1.msra.mxu0 %v54
    %126 = vmatprep.subr.mxu0 0.0
    %127 = vmatpush1.msra.mxu0 %v55
    %128 = vmatprep.subr.mxu0 0.0
    %129 = vmatpush1.msra.mxu0 %v56
    %130 = vmatprep.subr.mxu0 0.0
    %131 = vmatpush1.msra.mxu0 %v57
    %132 = vmatprep.subr.mxu0 0.0
    %133 = vmatpush1.msra.mxu0 %v58
    %134 = vmatprep.subr.mxu0 0.0
    %135 = vmatpush1.msra.mxu0 %v59
    %136 = vmatprep.subr.mxu0 0.0
    %137 = vmatpush1.msra.mxu0 %v60
    %138 = vmatprep.subr.mxu0 0.0
    %139 = vmatpush1.msra.mxu0 %v61
    %140 = vmatprep.subr.mxu0 0.0
    %141 = vmatpush1.msra.mxu0 %v62
    %142 = vmatprep.subr.mxu0 0.0
    %143 = vmatpush1.msra.mxu0 %v63
    %144 = vmatprep.subr.mxu0 0.0
    %145 = vmatpush1.msra.mxu0 %v64
    %146 = vmatprep.subr.mxu0 0.0
    %147 = vmatpush1.msra.mxu0 0.0
    %148 = vmatprep.subr.mxu0 0.0
    %149 = vmatpush1.msra.mxu0 0.0
    %150 = vmatprep.subr.mxu0 0.0
    %151 = vmatpush1.msra.mxu0 0.0
    %152 = vmatprep.subr.mxu0 0.0
    %153 = vmatpush1.msra.mxu0 0.0
    %154 = vmatprep.subr.mxu0 0.0
    %155 = vmatpush1.msra.mxu0 0.0
    %156 = vmatprep.subr.mxu0 0.0
    %157 = vmatpush1.msra.mxu0 0.0
    %158 = vmatprep.subr.mxu0 0.0
    %159 = vmatpush1.msra.mxu0 0.0
    %160 = vmatprep.subr.mxu0 0.0
    %161 = vmatpush1.msra.mxu0 0.0
    %162 = vmatprep.subr.mxu0 0.0
    %163 = vmatpush1.msra.mxu0 0.0
    %164 = vmatprep.subr.mxu0 0.0
    %165 = vmatpush1.msra.mxu0 0.0
    %166 = vmatprep.subr.mxu0 0.0
    %167 = vmatpush1.msra.mxu0 0.0
    %168 = vmatprep.subr.mxu0 0.0
    %169 = vmatpush1.msra.mxu0 0.0
    %170 = vmatprep.subr.mxu0 0.0
    %171 = vmatpush1.msra.mxu0 0.0
    %172 = vmatprep.subr.mxu0 0.0
    %173 = vmatpush1.msra.mxu0 0.0
    %174 = vmatprep.subr.mxu0 0.0
    %175 = vmatpush1.msra.mxu0 0.0
    %176 = vmatprep.subr.mxu0 0.0
    %177 = vmatpush1.msra.mxu0 0.0
    %178 = vmatprep.mubr.f32.mxu0 0.0
    %179 = vmatmul.mubr.f32.gmra.mrb[0].mxu0 %v65
    %v180 = vpop.f32.mrb[0].mxu0
    %v181 = vadd.f32 0.0, %v180
    %v182 = vpop.f32.mrb[0].mxu0
    %183 = vdwg.mxu0
    %184 = vmatprep.subr.mxu0 0.0
    %185 = vmatpush1.msra.mxu0 %v82
    %186 = vmatprep.subr.mxu0 0.0
    %187 = vmatpush1.msra.mxu0 %v83
    %188 = vmatprep.subr.mxu0 0.0
    %189 = vmatpush1.msra.mxu0 %v84
    %190 = vmatprep.subr.mxu0 0.0
    %191 = vmatpush1.msra.mxu0 %v85
    %192 = vmatprep.subr.mxu0 0.0
    %193 = vmatpush1.msra.mxu0 %v86
    %194 = vmatprep.subr.mxu0 0.0
    %195 = vmatpush1.msra.mxu0 %v87
    %196 = vmatprep.subr.mxu0 0.0
    %197 = vmatpush1.msra.mxu0 %v88
    %198 = vmatprep.subr.mxu0 0.0
    %199 = vmatpush1.msra.mxu0 %v89
    %200 = vmatprep.subr.mxu0 0.0
    %201 = vmatpush1.msra.mxu0 %v90
    %202 = vmatprep.subr.mxu0 0.0
    %203 = vmatpush1.msra.mxu0 %v91
    %204 = vmatprep.subr.mxu0 0.0
    %205 = vmatpush1.msra.mxu0 %v92
    %206 = vmatprep.subr.mxu0 0.0
    %207 = vmatpush1.msra.mxu0 %v93
    %208 = vmatprep.subr.mxu0 0.0
    %209 = vmatpush1.msra.mxu0 %v94
    %210 = vmatprep.subr.mxu0 0.0
    %211 = vmatpush1.msra.mxu0 %v95
    %212 = vmatprep.subr.mxu0 0.0
    %213 = vmatpush1.msra.mxu0 %v96
    %214 = vmatprep.subr.mxu0 0.0
    %215 = vmatpush1.msra.mxu0 %v97
    %216 = vmatprep.subr.mxu0 0.0
    %217 = vmatpush1.msra.mxu0 0.0
    %218 = vmatprep.subr.mxu0 0.0
    %219 = vmatpush1.msra.mxu0 0.0
    %220 = vmatprep.subr.mxu0 0.0
    %221 = vmatpush1.msra.mxu0 0.0
    %222 = vmatprep.subr.mxu0 0.0
    %223 = vmatpush1.msra.mxu0 0.0
    %224 = vmatprep.subr.mxu0 0.0
    %225 = vmatpush1.msra.mxu0 0.0
    %226 = vmatprep.subr.mxu0 0.0
    %227 = vmatpush1.msra.mxu0 0.0
    %228 = vmatprep.subr.mxu0 0.0
    %229 = vmatpush1.msra.mxu0 0.0
    %230 = vmatprep.subr.mxu0 0.0
    %231 = vmatpush1.msra.mxu0 0.0
    %232 = vmatprep.subr.mxu0 0.0
    %233 = vmatpush1.msra.mxu0 0.0
    %234 = vmatprep.subr.mxu0 0.0
    %235 = vmatpush1.msra.mxu0 0.0
    %236 = vmatprep.subr.mxu0 0.0
    %237 = vmatpush1.msra.mxu0 0.0
    %238 = vmatprep.subr.mxu0 0.0
    %239 = vmatpush1.msra.mxu0 0.0
    %240 = vmatprep.subr.mxu0 0.0
    %241 = vmatpush1.msra.mxu0 0.0
    %242 = vmatprep.subr.mxu0 0.0
    %243 = vmatpush1.msra.mxu0 0.0
    %244 = vmatprep.subr.mxu0 0.0
    %245 = vmatpush1.msra.mxu0 0.0
    %246 = vmatprep.subr.mxu0 0.0
    %247 = vmatpush1.msra.mxu0 0.0
    %248 = vmatprep.mubr.f32.mxu0 0.0
    %249 = vmatmul.mubr.f32.gmra.mrb[0].mxu0 %v181
    %v250 = vpop.f32.mrb[0].mxu0
    %v251 = vadd.f32 0.0, %v250
    %v252 = vpop.f32.mrb[0].mxu0
    %253 = vdwg.mxu0
    %v254 = vtanh.pop %v251
    %vm255 = vcmask 64512
    %v257 = vsel %vm255, %v66, 0
    %v260 = vsel %vm255, %v67, 0
    %v263 = vsel %vm255, %v68, 0
    %v266 = vsel %vm255, %v69, 0
    %v269 = vsel %vm255, %v70, 0
    %v272 = vsel %vm255, %v71, 0
    %v275 = vsel %vm255, %v72, 0
    %v278 = vsel %vm255, %v73, 0
    %v281 = vsel %vm255, %v74, 0
    %v284 = vsel %vm255, %v75, 0
    %v287 = vsel %vm255, %v76, 0
    %v290 = vsel %vm255, %v77, 0
    %v293 = vsel %vm255, %v78, 0
    %v296 = vsel %vm255, %v79, 0
    %v299 = vsel %vm255, %v80, 0
    %v302 = vsel %vm255, %v81, 0
    %304 = vmatprep.subr.mxu0 0.0
    %305 = vmatpush1.msra.mxu0 %v254
    %306 = vmatprep.subr.mxu0 0.0
    %307 = vmatpush1.msra.mxu0 0.0
    %308 = vmatprep.subr.mxu0 0.0
    %309 = vmatpush1.msra.mxu0 0.0
    %310 = vmatprep.subr.mxu0 0.0
    %311 = vmatpush1.msra.mxu0 0.0
    %312 = vmatprep.subr.mxu0 0.0
    %313 = vmatpush1.msra.mxu0 0.0
    %314 = vmatprep.subr.mxu0 0.0
    %315 = vmatpush1.msra.mxu0 0.0
    %316 = vmatprep.subr.mxu0 0.0
    %317 = vmatpush1.msra.mxu0 0.0
    %318 = vmatprep.subr.mxu0 0.0
    %319 = vmatpush1.msra.mxu0 0.0
    %320 = vmatprep.subr.mxu0 0.0
    %321 = vmatpush1.msra.mxu0 0.0
    %322 = vmatprep.subr.mxu0 0.0
    %323 = vmatpush1.msra.mxu0 0.0
    %324 = vmatprep.subr.mxu0 0.0
    %325 = vmatpush1.msra.mxu0 0.0
    %326 = vmatprep.subr.mxu0 0.0
    %327 = vmatpush1.msra.mxu0 0.0
    %328 = vmatprep.subr.mxu0 0.0
    %329 = vmatpush1.msra.mxu0 0.0
    %330 = vmatprep.subr.mxu0 0.0
    %331 = vmatpush1.msra.mxu0 0.0
    %332 = vmatprep.subr.mxu0 0.0
    %333 = vmatpush1.msra.mxu0 0.0
    %334 = vmatprep.subr.mxu0 0.0
    %335 = vmatpush1.msra.mxu0 0.0
    %336 = vmatprep.subr.mxu0 0.0
    %337 = vmatpush1.msra.mxu0 0.0
    %338 = vmatprep.subr.mxu0 0.0
    %339 = vmatpush1.msra.mxu0 0.0
    %340 = vmatprep.subr.mxu0 0.0
    %341 = vmatpush1.msra.mxu0 0.0
    %342 = vmatprep.subr.mxu0 0.0
    %343 = vmatpush1.msra.mxu0 0.0
    %344 = vmatprep.subr.mxu0 0.0
    %345 = vmatpush1.msra.mxu0 0.0
    %346 = vmatprep.subr.mxu0 0.0
    %347 = vmatpush1.msra.mxu0 0.0
    %348 = vmatprep.subr.mxu0 0.0
    %349 = vmatpush1.msra.mxu0 0.0
    %350 = vmatprep.subr.mxu0 0.0
    %351 = vmatpush1.msra.mxu0 0.0
    %352 = vmatprep.subr.mxu0 0.0
    %353 = vmatpush1.msra.mxu0 0.0
    %354 = vmatprep.subr.mxu0 0.0
    %355 = vmatpush1.msra.mxu0 0.0
    %356 = vmatprep.subr.mxu0 0.0
    %357 = vmatpush1.msra.mxu0 0.0
    %358 = vmatprep.subr.mxu0 0.0
    %359 = vmatpush1.msra.mxu0 0.0
    %360 = vmatprep.subr.mxu0 0.0
    %361 = vmatpush1.msra.mxu0 0.0
    %362 = vmatprep.subr.mxu0 0.0
    %363 = vmatpush1.msra.mxu0 0.0
    %364 = vmatprep.subr.mxu0 0.0
    %365 = vmatpush1.msra.mxu0 0.0
    %366 = vmatprep.subr.mxu0 0.0
    %367 = vmatpush1.msra.mxu0 0.0
    %368 = vmatprep.mubr.f32.mxu0 0.0
    %369 = vmatmul.mubr.f32.gmra.mrb[0].mxu0 %v257
    %v370 = vpop.f32.mrb[0].mxu0
    %v371 = vadd.f32 0.0, %v370
    %v372 = vpop.f32.mrb[0].mxu0
    %373 = vmatprep.mubr.f32.mxu0 0.0
    %374 = vmatmul.mubr.f32.gmra.mrb[0].mxu0 %v260
    %v375 = vpop.f32.mrb[0].mxu0
    %v376 = vadd.f32 0.0, %v375
    %v377 = vpop.f32.mrb[0].mxu0
    %378 = vmatprep.mubr.f32.mxu0 0.0
    %379 = vmatmul.mubr.f32.gmra.mrb[0].mxu0 %v263
    %v380 = vpop.f32.mrb[0].mxu0
    %v381 = vadd.f32 0.0, %v380
    %v382 = vpop.f32.mrb[0].mxu0
    %383 = vmatprep.mubr.f32.mxu0 0.0
    %384 = vmatmul.mubr.f32.gmra.mrb[0].mxu0 %v266
    %v385 = vpop.f32.mrb[0].mxu0
    %v386 = vadd.f32 0.0, %v385
    %v387 = vpop.f32.mrb[0].mxu0
    %388 = vmatprep.mubr.f32.mxu0 0.0
    %389 = vmatmul.mubr.f32.gmra.mrb[0].mxu0 %v269
    %v390 = vpop.f32.mrb[0].mxu0
    %v391 = vadd.f32 0.0, %v390
    %v392 = vpop.f32.mrb[0].mxu0
    %393 = vmatprep.mubr.f32.mxu0 0.0
    %394 = vmatmul.mubr.f32.gmra.mrb[0].mxu0 %v272
    %v395 = vpop.f32.mrb[0].mxu0
    %v396 = vadd.f32 0.0, %v395
    %v397 = vpop.f32.mrb[0].mxu0
    %398 = vmatprep.mubr.f32.mxu0 0.0
    %399 = vmatmul.mubr.f32.gmra.mrb[0].mxu0 %v275
    %v400 = vpop.f32.mrb[0].mxu0
    %v401 = vadd.f32 0.0, %v400
    %v402 = vpop.f32.mrb[0].mxu0
    %403 = vmatprep.mubr.f32.mxu0 0.0
    %404 = vmatmul.mubr.f32.gmra.mrb[0].mxu0 %v278
    %v405 = vpop.f32.mrb[0].mxu0
    %v406 = vadd.f32 0.0, %v405
    %v407 = vpop.f32.mrb[0].mxu0
    %408 = vmatprep.mubr.f32.mxu0 0.0
    %409 = vmatmul.mubr.f32.gmra.mrb[0].mxu0 %v281
    %v410 = vpop.f32.mrb[0].mxu0
    %v411 = vadd.f32 0.0, %v410
    %v412 = vpop.f32.mrb[0].mxu0
    %413 = vmatprep.mubr.f32.mxu0 0.0
    %414 = vmatmul.mubr.f32.gmra.mrb[0].mxu0 %v284
    %v415 = vpop.f32.mrb[0].mxu0
    %v416 = vadd.f32 0.0, %v415
    %v417 = vpop.f32.mrb[0].mxu0
    %418 = vmatprep.mubr.f32.mxu0 0.0
    %419 = vmatmul.mubr.f32.gmra.mrb[0].mxu0 %v287
    %v420 = vpop.f32.mrb[0].mxu0
    %v421 = vadd.f32 0.0, %v420
    %v422 = vpop.f32.mrb[0].mxu0
    %423 = vmatprep.mubr.f32.mxu0 0.0
    %424 = vmatmul.mubr.f32.gmra.mrb[0].mxu0 %v290
    %v425 = vpop.f32.mrb[0].mxu0
    %v426 = vadd.f32 0.0, %v425
    %v427 = vpop.f32.mrb[0].mxu0
    %428 = vmatprep.mubr.f32.mxu0 0.0
    %429 = vmatmul.mubr.f32.gmra.mrb[0].mxu0 %v293
    %v430 = vpop.f32.mrb[0].mxu0
    %v431 = vadd.f32 0.0, %v430
    %v432 = vpop.f32.mrb[0].mxu0
    %433 = vmatprep.mubr.f32.mxu0 0.0
    %434 = vmatmul.mubr.f32.gmra.mrb[0].mxu0 %v296
    %v435 = vpop.f32.mrb[0].mxu0
    %v436 = vadd.f32 0.0, %v435
    %v437 = vpop.f32.mrb[0].mxu0
    %438 = vmatprep.mubr.f32.mxu0 0.0
    %439 = vmatmul.mubr.f32.gmra.mrb[0].mxu0 %v299
    %v440 = vpop.f32.mrb[0].mxu0
    %v441 = vadd.f32 0.0, %v440
    %v442 = vpop.f32.mrb[0].mxu0
    %443 = vmatprep.mubr.f32.mxu0 0.0
    %444 = vmatmul.mubr.f32.gmra.mrb[0].mxu0 %v302
    %v445 = vpop.f32.mrb[0].mxu0
    %v446 = vadd.f32 0.0, %v445
    %v447 = vpop.f32.mrb[0].mxu0
    %448 = vdwg.mxu0
    %v449 = vmul.f32 %v49, %v371
    %v450 = vmul.f32 %v50, %v376
    %v451 = vmul.f32 %v51, %v381
    %v452 = vmul.f32 %v52, %v386
    %v453 = vmul.f32 %v53, %v391
    %v454 = vmul.f32 %v54, %v396
    %v455 = vmul.f32 %v55, %v401
    %v456 = vmul.f32 %v56, %v406
    %v457 = vmul.f32 %v57, %v411
    %v458 = vmul.f32 %v58, %v416
    %v459 = vmul.f32 %v59, %v421
    %v460 = vmul.f32 %v60, %v426
    %v461 = vmul.f32 %v61, %v431
    %v462 = vmul.f32 %v62, %v436
    %v463 = vmul.f32 %v63, %v441
    %v464 = vmul.f32 %v64, %v446
    %465 = vmatprep.subr.mxu0 0.0
    %466 = vmatpush1.msra.mxu0 %v98
    %467 = vmatprep.subr.mxu0 0.0
    %468 = vmatpush1.msra.mxu0 %v99
    %469 = vmatprep.subr.mxu0 0.0
    %470 = vmatpush1.msra.mxu0 %v100
    %471 = vmatprep.subr.mxu0 0.0
    %472 = vmatpush1.msra.mxu0 %v101
    %473 = vmatprep.subr.mxu0 0.0
    %474 = vmatpush1.msra.mxu0 %v102
    %475 = vmatprep.subr.mxu0 0.0
    %476 = vmatpush1.msra.mxu0 %v103
    %477 = vmatprep.subr.mxu0 0.0
    %478 = vmatpush1.msra.mxu0 %v104
    %479 = vmatprep.subr.mxu0 0.0
    %480 = vmatpush1.msra.mxu0 %v105
    %481 = vmatprep.subr.mxu0 0.0
    %482 = vmatpush1.msra.mxu0 %v106
    %483 = vmatprep.subr.mxu0 0.0
    %484 = vmatpush1.msra.mxu0 %v107
    %485 = vmatprep.subr.mxu0 0.0
    %486 = vmatpush1.msra.mxu0 %v108
    %487 = vmatprep.subr.mxu0 0.0
    %488 = vmatpush1.msra.mxu0 %v109
    %489 = vmatprep.subr.mxu0 0.0
    %490 = vmatpush1.msra.mxu0 %v110
    %491 = vmatprep.subr.mxu0 0.0
    %492 = vmatpush1.msra.mxu0 %v111
    %493 = vmatprep.subr.mxu0 0.0
    %494 = vmatpush1.msra.mxu0 %v112
    %495 = vmatprep.subr.mxu0 0.0
    %496 = vmatpush1.msra.mxu0 %v113
    %497 = vmatprep.subr.mxu0 0.0
    %498 = vmatpush1.msra.mxu0 0.0
    %499 = vmatprep.subr.mxu0 0.0
    %500 = vmatpush1.msra.mxu0 0.0
    %501 = vmatprep.subr.mxu0 0.0
    %502 = vmatpush1.msra.mxu0 0.0
    %503 = vmatprep.subr.mxu0 0.0
    %504 = vmatpush1.msra.mxu0 0.0
    %505 = vmatprep.subr.mxu0 0.0
    %506 = vmatpush1.msra.mxu0 0.0
    %507 = vmatprep.subr.mxu0 0.0
    %508 = vmatpush1.msra.mxu0 0.0
    %509 = vmatprep.subr.mxu0 0.0
    %510 = vmatpush1.msra.mxu0 0.0
    %511 = vmatprep.subr.mxu0 0.0
    %512 = vmatpush1.msra.mxu0 0.0
    %513 = vmatprep.subr.mxu0 0.0
    %514 = vmatpush1.msra.mxu0 0.0
    %515 = vmatprep.subr.mxu0 0.0
    %516 = vmatpush1.msra.mxu0 0.0
    %517 = vmatprep.subr.mxu0 0.0
    %518 = vmatpush1.msra.mxu0 0.0
    %519 = vmatprep.subr.mxu0 0.0
    %520 = vmatpush1.msra.mxu0 0.0
    %521 = vmatprep.subr.mxu0 0.0
    %522 = vmatpush1.msra.mxu0 0.0
    %523 = vmatprep.subr.mxu0 0.0
    %524 = vmatpush1.msra.mxu0 0.0
    %525 = vmatprep.subr.mxu0 0.0
    %526 = vmatpush1.msra.mxu0 0.0
    %527 = vmatprep.subr.mxu0 0.0
    %528 = vmatpush1.msra.mxu0 0.0
    %529 = vmatprep.mubr.f32.mxu0 0.0
    %530 = vmatmul.mubr.f32.gmra.mrb[0].mxu0 %v449
    %v531 = vpop.f32.mrb[0].mxu0
    %v532 = vadd.f32 0.0, %v531
    %v533 = vpop.f32.mrb[0].mxu0
    %534 = vmatprep.mubr.f32.mxu0 0.0
    %535 = vmatmul.mubr.f32.gmra.mrb[0].mxu0 %v450
    %v536 = vpop.f32.mrb[0].mxu0
    %v537 = vadd.f32 0.0, %v536
    %v538 = vpop.f32.mrb[0].mxu0
    %539 = vmatprep.mubr.f32.mxu0 0.0
    %540 = vmatmul.mubr.f32.gmra.mrb[0].mxu0 %v451
    %v541 = vpop.f32.mrb[0].mxu0
    %v542 = vadd.f32 0.0, %v541
    %v543 = vpop.f32.mrb[0].mxu0
    %544 = vmatprep.mubr.f32.mxu0 0.0
    %545 = vmatmul.mubr.f32.gmra.mrb[0].mxu0 %v452
    %v546 = vpop.f32.mrb[0].mxu0
    %v547 = vadd.f32 0.0, %v546
    %v548 = vpop.f32.mrb[0].mxu0
    %549 = vmatprep.mubr.f32.mxu0 0.0
    %550 = vmatmul.mubr.f32.gmra.mrb[0].mxu0 %v453
    %v551 = vpop.f32.mrb[0].mxu0
    %v552 = vadd.f32 0.0, %v551
    %v553 = vpop.f32.mrb[0].mxu0
    %554 = vmatprep.mubr.f32.mxu0 0.0
    %555 = vmatmul.mubr.f32.gmra.mrb[0].mxu0 %v454
    %v556 = vpop.f32.mrb[0].mxu0
    %v557 = vadd.f32 0.0, %v556
    %v558 = vpop.f32.mrb[0].mxu0
    %559 = vmatprep.mubr.f32.mxu0 0.0
    %560 = vmatmul.mubr.f32.gmra.mrb[0].mxu0 %v455
    %v561 = vpop.f32.mrb[0].mxu0
    %v562 = vadd.f32 0.0, %v561
    %v563 = vpop.f32.mrb[0].mxu0
    %564 = vmatprep.mubr.f32.mxu0 0.0
    %565 = vmatmul.mubr.f32.gmra.mrb[0].mxu0 %v456
    %v566 = vpop.f32.mrb[0].mxu0
    %v567 = vadd.f32 0.0, %v566
    %v568 = vpop.f32.mrb[0].mxu0
    %569 = vmatprep.mubr.f32.mxu0 0.0
    %570 = vmatmul.mubr.f32.gmra.mrb[0].mxu0 %v457
    %v571 = vpop.f32.mrb[0].mxu0
    %v572 = vadd.f32 0.0, %v571
    %v573 = vpop.f32.mrb[0].mxu0
    %574 = vmatprep.mubr.f32.mxu0 0.0
    %575 = vmatmul.mubr.f32.gmra.mrb[0].mxu0 %v458
    %v576 = vpop.f32.mrb[0].mxu0
    %v577 = vadd.f32 0.0, %v576
    %v578 = vpop.f32.mrb[0].mxu0
    %579 = vmatprep.mubr.f32.mxu0 0.0
    %580 = vmatmul.mubr.f32.gmra.mrb[0].mxu0 %v459
    %v581 = vpop.f32.mrb[0].mxu0
    %v582 = vadd.f32 0.0, %v581
    %v583 = vpop.f32.mrb[0].mxu0
    %584 = vmatprep.mubr.f32.mxu0 0.0
    %585 = vmatmul.mubr.f32.gmra.mrb[0].mxu0 %v460
    %v586 = vpop.f32.mrb[0].mxu0
    %v587 = vadd.f32 0.0, %v586
    %v588 = vpop.f32.mrb[0].mxu0
    %589 = vmatprep.mubr.f32.mxu0 0.0
    %590 = vmatmul.mubr.f32.gmra.mrb[0].mxu0 %v461
    %v591 = vpop.f32.mrb[0].mxu0
    %v592 = vadd.f32 0.0, %v591
    %v593 = vpop.f32.mrb[0].mxu0
    %594 = vmatprep.mubr.f32.mxu0 0.0
    %595 = vmatmul.mubr.f32.gmra.mrb[0].mxu0 %v462
    %v596 = vpop.f32.mrb[0].mxu0
    %v597 = vadd.f32 0.0, %v596
    %v598 = vpop.f32.mrb[0].mxu0
    %599 = vmatprep.mubr.f32.mxu0 0.0
    %600 = vmatmul.mubr.f32.gmra.mrb[0].mxu0 %v463
    %v601 = vpop.f32.mrb[0].mxu0
    %v602 = vadd.f32 0.0, %v601
    %v603 = vpop.f32.mrb[0].mxu0
    %604 = vmatprep.mubr.f32.mxu0 0.0
    %605 = vmatmul.mubr.f32.gmra.mrb[0].mxu0 %v464
    %v606 = vpop.f32.mrb[0].mxu0
    %v607 = vadd.f32 0.0, %v606
    %v608 = vpop.f32.mrb[0].mxu0
    %609 = vdwg.mxu0
    %v610 = vxor.u32 %v532, 2147483648
    %v611 = vxor.u32 %v537, 2147483648
    %v612 = vxor.u32 %v542, 2147483648
    %v613 = vxor.u32 %v547, 2147483648
    %v614 = vxor.u32 %v552, 2147483648
    %v615 = vxor.u32 %v557, 2147483648
    %v616 = vxor.u32 %v562, 2147483648
    %v617 = vxor.u32 %v567, 2147483648
    %v618 = vxor.u32 %v572, 2147483648
    %v619 = vxor.u32 %v577, 2147483648
    %v620 = vxor.u32 %v582, 2147483648
    %v621 = vxor.u32 %v587, 2147483648
    %v622 = vxor.u32 %v592, 2147483648
    %v623 = vxor.u32 %v597, 2147483648
    %v624 = vxor.u32 %v602, 2147483648
    %v625 = vxor.u32 %v607, 2147483648
    %v626 = vmul.f32 %v610, 1.442695
    %v627 = vpow.pop %v626
    %v628 = vmul.f32 %v611, 1.442695
    %v629 = vpow.pop %v628
    %v630 = vmul.f32 %v612, 1.442695
    %v631 = vpow.pop %v630
    %v632 = vmul.f32 %v613, 1.442695
    %v633 = vpow.pop %v632
    %v634 = vmul.f32 %v614, 1.442695
    %v635 = vpow.pop %v634
    %v636 = vmul.f32 %v615, 1.442695
    %v637 = vpow.pop %v636
    %v638 = vmul.f32 %v616, 1.442695
    %v639 = vpow.pop %v638
    %v640 = vmul.f32 %v617, 1.442695
    %v641 = vpow.pop %v640
    %v642 = vmul.f32 %v618, 1.442695
    %v643 = vpow.pop %v642
    %v644 = vmul.f32 %v619, 1.442695
    %v645 = vpow.pop %v644
    %v646 = vmul.f32 %v620, 1.442695
    %v647 = vpow.pop %v646
    %v648 = vmul.f32 %v621, 1.442695
    %v649 = vpow.pop %v648
    %v650 = vmul.f32 %v622, 1.442695
    %v651 = vpow.pop %v650
    %v652 = vmul.f32 %v623, 1.442695
    %v653 = vpow.pop %v652
    %v654 = vmul.f32 %v624, 1.442695
    %v655 = vpow.pop %v654
    %v656 = vmul.f32 %v625, 1.442695
    %v657 = vpow.pop %v656
    %v658 = vadd.f32 %v627, 1.0
    %v659 = vadd.f32 %v629, 1.0
    %v660 = vadd.f32 %v631, 1.0
    %v661 = vadd.f32 %v633, 1.0
    %v662 = vadd.f32 %v635, 1.0
    %v663 = vadd.f32 %v637, 1.0
    %v664 = vadd.f32 %v639, 1.0
    %v665 = vadd.f32 %v641, 1.0
    %v666 = vadd.f32 %v643, 1.0
    %v667 = vadd.f32 %v645, 1.0
    %v668 = vadd.f32 %v647, 1.0
    %v669 = vadd.f32 %v649, 1.0
    %v670 = vadd.f32 %v651, 1.0
    %v671 = vadd.f32 %v653, 1.0
    %v672 = vadd.f32 %v655, 1.0
    %v673 = vadd.f32 %v657, 1.0
    %v674 = vrcp.pop %v658
    %v675 = vmul.f32 1.0, %v674
    %v676 = vrcp.pop %v659
    %v677 = vmul.f32 1.0, %v676
    %v678 = vrcp.pop %v660
    %v679 = vmul.f32 1.0, %v678
    %v680 = vrcp.pop %v661
    %v681 = vmul.f32 1.0, %v680
    %v682 = vrcp.pop %v662
    %v683 = vmul.f32 1.0, %v682
    %v684 = vrcp.pop %v663
    %v685 = vmul.f32 1.0, %v684
    %v686 = vrcp.pop %v664
    %v687 = vmul.f32 1.0, %v686
    %v688 = vrcp.pop %v665
    %v689 = vmul.f32 1.0, %v688
    %v690 = vrcp.pop %v666
    %v691 = vmul.f32 1.0, %v690
    %v692 = vrcp.pop %v667
    %v693 = vmul.f32 1.0, %v692
    %v694 = vrcp.pop %v668
    %v695 = vmul.f32 1.0, %v694
    %v696 = vrcp.pop %v669
    %v697 = vmul.f32 1.0, %v696
    %v698 = vrcp.pop %v670
    %v699 = vmul.f32 1.0, %v698
    %v700 = vrcp.pop %v671
    %v701 = vmul.f32 1.0, %v700
    %v702 = vrcp.pop %v672
    %v703 = vmul.f32 1.0, %v702
    %v704 = vrcp.pop %v673
    %v705 = vmul.f32 1.0, %v704
    %v706 = vmul.f32 %v49, %v675
    %v707 = vmul.f32 %v50, %v677
    %v708 = vmul.f32 %v51, %v679
    %v709 = vmul.f32 %v52, %v681
    %v710 = vmul.f32 %v53, %v683
    %v711 = vmul.f32 %v54, %v685
    %v712 = vmul.f32 %v55, %v687
    %v713 = vmul.f32 %v56, %v689
    %v714 = vmul.f32 %v57, %v691
    %v715 = vmul.f32 %v58, %v693
    %v716 = vmul.f32 %v59, %v695
    %v717 = vmul.f32 %v60, %v697
    %v718 = vmul.f32 %v61, %v699
    %v719 = vmul.f32 %v62, %v701
    %v720 = vmul.f32 %v63, %v703
    %v721 = vmul.f32 %v64, %v705
    %722 = vmatprep.subr.mxu0 0.0
    %723 = vmatpush1.msra.mxu0 %v706
    %724 = vmatprep.subr.mxu0 0.0
    %725 = vmatpush1.msra.mxu0 %v707
    %726 = vmatprep.subr.mxu0 0.0
    %727 = vmatpush1.msra.mxu0 %v708
    %728 = vmatprep.subr.mxu0 0.0
    %729 = vmatpush1.msra.mxu0 %v709
    %730 = vmatprep.subr.mxu0 0.0
    %731 = vmatpush1.msra.mxu0 %v710
    %732 = vmatprep.subr.mxu0 0.0
    %733 = vmatpush1.msra.mxu0 %v711
    %734 = vmatprep.subr.mxu0 0.0
    %735 = vmatpush1.msra.mxu0 %v712
    %736 = vmatprep.subr.mxu0 0.0
    %737 = vmatpush1.msra.mxu0 %v713
    %738 = vmatprep.subr.mxu0 0.0
    %739 = vmatpush1.msra.mxu0 %v714
    %740 = vmatprep.subr.mxu0 0.0
    %741 = vmatpush1.msra.mxu0 %v715
    %742 = vmatprep.subr.mxu0 0.0
    %743 = vmatpush1.msra.mxu0 %v716
    %744 = vmatprep.subr.mxu0 0.0
    %745 = vmatpush1.msra.mxu0 %v717
    %746 = vmatprep.subr.mxu0 0.0
    %747 = vmatpush1.msra.mxu0 %v718
    %748 = vmatprep.subr.mxu0 0.0
    %749 = vmatpush1.msra.mxu0 %v719
    %750 = vmatprep.subr.mxu0 0.0
    %751 = vmatpush1.msra.mxu0 %v720
    %752 = vmatprep.subr.mxu0 0.0
    %753 = vmatpush1.msra.mxu0 %v721
    %754 = vmatprep.subr.mxu0 0.0
    %755 = vmatpush1.msra.mxu0 0.0
    %756 = vmatprep.subr.mxu0 0.0
    %757 = vmatpush1.msra.mxu0 0.0
    %758 = vmatprep.subr.mxu0 0.0
    %759 = vmatpush1.msra.mxu0 0.0
    %760 = vmatprep.subr.mxu0 0.0
    %761 = vmatpush1.msra.mxu0 0.0
    %762 = vmatprep.subr.mxu0 0.0
    %763 = vmatpush1.msra.mxu0 0.0
    %764 = vmatprep.subr.mxu0 0.0
    %765 = vmatpush1.msra.mxu0 0.0
    %766 = vmatprep.subr.mxu0 0.0
    %767 = vmatpush1.msra.mxu0 0.0
    %768 = vmatprep.subr.mxu0 0.0
    %769 = vmatpush1.msra.mxu0 0.0
    %770 = vmatprep.subr.mxu0 0.0
    %771 = vmatpush1.msra.mxu0 0.0
    %772 = vmatprep.subr.mxu0 0.0
    %773 = vmatpush1.msra.mxu0 0.0
    %774 = vmatprep.subr.mxu0 0.0
    %775 = vmatpush1.msra.mxu0 0.0
    %776 = vmatprep.subr.mxu0 0.0
    %777 = vmatpush1.msra.mxu0 0.0
    %778 = vmatprep.subr.mxu0 0.0
    %779 = vmatpush1.msra.mxu0 0.0
    %780 = vmatprep.subr.mxu0 0.0
    %781 = vmatpush1.msra.mxu0 0.0
    %782 = vmatprep.subr.mxu0 0.0
    %783 = vmatpush1.msra.mxu0 0.0
    %784 = vmatprep.subr.mxu0 0.0
    %785 = vmatpush1.msra.mxu0 0.0
    %786 = vmatprep.mubr.f32.mxu0 0.0
    %787 = vmatmul.mubr.f32.gmra.mrb[0].mxu0 %v65
    %v788 = vpop.f32.mrb[0].mxu0
    %v789 = vadd.f32 0.0, %v788
    %v790 = vpop.f32.mrb[0].mxu0
    %791 = vdwg.mxu0
    %792 = vst [vmem:[#allocation7] sm:$0xff] %v789
    // Predicated region
    $region30: #{tpu_custom_call.1} parent=1 // pred_check
      _
    $region31: #{tpu_custom_call.1} parent=1 // pred_check_branch
      %794 = sbr.rel (0) target = $region33
    $region32: #{tpu_custom_call.1} parent=1 // pred_region
      %s796 = ssub.s32 128, 128
      %797 = vsyncadd [#allocation4], %s796
      %s799 = sshll.u32 [#allocation7], 4
      %s800 = int_to_ptr.vmem [resolvable:$true] %s799
      %802 = dma.vmem_to_hbm [thread:$0]  %s800, 128, %s5, [#allocation4]
    $region33: #{tpu_custom_call.1} parent=1 // pred_fallthru
      _
    // Predicated region
    $region34: #{tpu_custom_call.1} parent=1 // pred_check
      _
    $region35: #{tpu_custom_call.1} parent=1 // pred_check_branch
      %804 = sbr.rel (0) target = $region37
    $region36: #{tpu_custom_call.1} parent=1 // pred_region
      %805 = dma.done [#allocation4], 128
    $region37: #{tpu_custom_call.1} parent=1 // pred_fallthru
      _
    %806 = vsyncpa [#allocation3], 1
    %807 = vsyncpa [#allocation6], 1
    %808 = vsyncpa [#allocation4], 1

</llo_original>
